<compile_context>
chip_gen: v7x
topology: tpu7x:2x2x1
jax: 0.10.0
libtpu: 0.0.40
codegen_flags: <defaults>
</compile_context>

<pallas_src>
import jax
import jax.numpy as jnp
import numpy as np
from jax.experimental import pallas as pl
from jax.experimental.pallas import tpu as pltpu

EMBEDDING_DIM = 7   # unused by the forward pass (kept for parity with the module)
HIDDEN_DIM = 1
INPUT_DIM = 1
SEQ_LEN = 4

X_MIN = 0.0         # Normalization(min_dim=0, max_dim=12)
X_MAX = 12.0

LANES = 128                 # lane axis of a vreg
DEFAULT_TILE_SUBLANES = 256 # sublanes per grid step -> 256*128 = 32768 sequences / step
                            # (x block = 4*256*128*4 B = 512 KiB; in+out double-buffered ~2 MiB,
                            #  well under the 16/32 MiB scoped-VMEM defaults on v5e/v6e/v7x)
PARAM_LEN = 16              # packed scalar-parameter vector length (14 used, padded)


def _round_up(v, m):
    return ((v + m - 1) // m) * m


def lstm_kernel(p_ref, x_ref, out_ref):
    """One batch tile of the LSTM recurrence + Linear head.

    p_ref   : (PARAM_LEN,) f32 in SMEM (scalar prefetch):
                [0:4]  W_ih per gate [i,f,g,o], pre-scaled by 1/(X_MAX - X_MIN)
                [4:8]  W_hh per gate
                [8:12] b_ih + b_hh per gate (with X_MIN folded in)
                [12]   Linear weight, [13] Linear bias
    x_ref   : (SEQ_LEN, TILE_SUBLANES, 128) raw inputs, one independent sequence per
              (sublane, lane) slot — full vreg tiles.
    out_ref : (SEQ_LEN, TILE_SUBLANES, 128) Linear(LSTM(x)) per step, per sequence.
    """
    # Scalar parameters straight from SMEM; scalar x vector broadcast does the rest.
    wi, wf, wg, wo = p_ref[0], p_ref[1], p_ref[2], p_ref[3]
    ui, uf, ug, uo = p_ref[4], p_ref[5], p_ref[6], p_ref[7]
    bi, bf, bg, bo = p_ref[8], p_ref[9], p_ref[10], p_ref[11]
    lw, lb = p_ref[12], p_ref[13]

    tile_shape = (x_ref.shape[1], x_ref.shape[2])   # (TILE_SUBLANES, 128)
    h = jnp.zeros(tile_shape, jnp.float32)
    c = jnp.zeros(tile_shape, jnp.float32)

    # SEQ_LEN is tiny and static -> unrolled recurrence (inherently sequential in time).
    for t in range(SEQ_LEN):
        x_t = x_ref[t]                               # (TILE_SUBLANES, 128), full vreg tiles
        # Only the transcendentals that are actually needed: 3 sigmoid + 2 tanh per step.
        i_g = jax.nn.sigmoid(wi * x_t + ui * h + bi)
        f_g = jax.nn.sigmoid(wf * x_t + uf * h + bf)
        g_g = jnp.tanh(wg * x_t + ug * h + bg)
        o_g = jax.nn.sigmoid(wo * x_t + uo * h + bo)
        c = f_g * c + i_g * g_g
        h = o_g * jnp.tanh(c)
        out_ref[t] = lw * h + lb                     # unmasked full-tile store


def pack_params(params):
    """Pack LSTM + Linear scalars into one (PARAM_LEN,) f32 vector (built once, host side).

    Folds the input normalization (x - X_MIN) / (X_MAX - X_MIN) into W_ih and the bias.
    """
    wih, whh, bih, bhh, lw, lb = params   # torch shapes: (4,1),(4,1),(4,),(4,),(1,1),(1,)
    inv_range = 1.0 / (X_MAX - X_MIN)
    wih = wih.astype(jnp.float32).reshape(4)
    whh = whh.astype(jnp.float32).reshape(4)
    w_eff = wih * inv_range
    b_eff = bih.astype(jnp.float32) + bhh.astype(jnp.float32) - wih * (X_MIN * inv_range)

    buf = jnp.zeros((PARAM_LEN,), jnp.float32)
    buf = buf.at[0:4].set(w_eff)
    buf = buf.at[4:8].set(whh)
    buf = buf.at[8:12].set(b_eff)
    buf = buf.at[12].set(lw.astype(jnp.float32)[0, 0])
    buf = buf.at[13].set(lb.astype(jnp.float32)[0])
    return buf


def custom_lstm_forward_batched(x_batch, params, *, max_tile_sublanes=DEFAULT_TILE_SUBLANES):
    """x_batch: (SEQ_LEN, B) raw values, one independent sequence per column (any B >= 1;
    the wrapper pads internally). Returns (SEQ_LEN, B, INPUT_DIM) — vmap of the PyTorch
    module over B."""
    s, b = x_batch.shape
    assert s == SEQ_LEN
    packed = pack_params(params)

    # Choose a sublane tile (multiple of 8), pad B so the grid divides exactly.
    r = -(-b // LANES)                                        # 128-lane rows needed
    sub = max(8, min(_round_up(max_tile_sublanes, 8), _round_up(r, 8)))
    r_pad = _round_up(r, sub)
    b_pad = r_pad * LANES
    n_tiles = r_pad // sub

    x = x_batch.astype(jnp.float32)
    if b_pad != b:
        x = jnp.pad(x, ((0, 0), (0, b_pad - b)))
    x3 = x.reshape(SEQ_LEN, r_pad, LANES)

    out = pl.pallas_call(
        lstm_kernel,
        out_shape=jax.ShapeDtypeStruct((SEQ_LEN, r_pad, LANES), jnp.float32),
        grid_spec=pltpu.PrefetchScalarGridSpec(
            num_scalar_prefetch=1,                            # packed params -> SMEM
            grid=(n_tiles,),
            in_specs=[
                pl.BlockSpec((SEQ_LEN, sub, LANES), lambda j, p: (0, j, 0)),
            ],
            out_specs=pl.BlockSpec((SEQ_LEN, sub, LANES), lambda j, p: (0, j, 0)),
        ),
        compiler_params=pltpu.CompilerParams(
            dimension_semantics=("parallel",),                # batch tiles are independent
            vmem_limit_bytes=32 * 1024 * 1024,                # explicit, safe on v5e/v6e/v7x
        ),
    )(packed, x3)

    out = out.reshape(SEQ_LEN, b_pad)[:, :b]
    return out.reshape(SEQ_LEN, b, INPUT_DIM)


def custom_lstm_forward(x, params):
    """x: (SEQ_LEN,) raw scalars — the original single-sequence PyTorch forward.
    Returns (SEQ_LEN, 1, 1)."""
    xb = x.astype(jnp.float32).reshape(SEQ_LEN, 1)
    return custom_lstm_forward_batched(xb, params)


def init_params(key):
    """Deterministic init matching PyTorch shapes.

    nn.LSTM(1, 1):  weight_ih_l0 (4,1), weight_hh_l0 (4,1), bias_ih_l0 (4,), bias_hh_l0 (4,)
    nn.Linear(1,1): weight (1,1), bias (1,)
    PyTorch inits uniform(-1/sqrt(hidden), 1/sqrt(hidden)); hidden=1 -> U(-1, 1).
    """
    ks = jax.random.split(key, 6)
    u = lambda k, shape: jax.random.uniform(k, shape, jnp.float32, -1.0, 1.0)
    wih = u(ks[0], (4, 1))
    whh = u(ks[1], (4, 1))
    bih = u(ks[2], (4,))
    bhh = u(ks[3], (4,))
    lw = u(ks[4], (1, 1))
    lb = u(ks[5], (1,))
    return wih, whh, bih, bhh, lw, lb


def reference_forward_batched(x_batch, params):
    """Pure-JAX reference: lax.scan LSTM applied independently to every column of x_batch.
    Uses the un-folded normalize-then-LSTM formulation to validate the weight folding."""
    wih, whh, bih, bhh, lw, lb = params
    xn = (x_batch.astype(jnp.float32) - X_MIN) / (X_MAX - X_MIN)   # (S, B)
    b = bih + bhh
    w = wih[:, 0]
    u = whh[:, 0]

    def step(carry, xt):                                           # xt: (B,)
        h, c = carry
        i = jax.nn.sigmoid(w[0] * xt + u[0] * h + b[0])
        f = jax.nn.sigmoid(w[1] * xt + u[1] * h + b[1])
        g = jnp.tanh(w[2] * xt + u[2] * h + b[2])
        o = jax.nn.sigmoid(w[3] * xt + u[3] * h + b[3])
        c = f * c + i * g
        h = o * jnp.tanh(c)
        return (h, c), lw[0, 0] * h + lb[0]

    bsz = x_batch.shape[1]
    z = jnp.zeros((bsz,), jnp.float32)
    (_, _), ys = jax.lax.scan(step, (z, z), xn)
    return ys.reshape(SEQ_LEN, bsz, INPUT_DIM)


if __name__ == "__main__":
    key = jax.random.PRNGKey(0)
    k_param, k_x = jax.random.split(key)
    params = init_params(k_param)

    # Batched workload: 2048 independent sequences.
    B = 2048
    xb = jax.random.uniform(k_x, (SEQ_LEN, B), jnp.float32, 0.0, 12.0)
    ref = reference_forward_batched(xb, params)

    # Small 8-sublane tiles -> 2 grid steps: exercises the multi-tile ("parallel") path.
    out_small = jax.block_until_ready(
        custom_lstm_forward_batched(xb, params, max_tile_sublanes=8))
    assert out_small.shape == (SEQ_LEN, B, INPUT_DIM)
    np.testing.assert_allclose(np.asarray(out_small), np.asarray(ref), rtol=1e-5, atol=1e-5)

    # Default wide-tile path (one fat grid step at this batch size).
    out_wide = jax.block_until_ready(custom_lstm_forward_batched(xb, params))
    np.testing.assert_allclose(np.asarray(out_wide), np.asarray(ref), rtol=1e-5, atol=1e-5)

    # Single-sequence path: exact PyTorch-module semantics (seq_len, batch=1, input_dim).
    x1 = xb[:, 0]
    out1 = jax.block_until_ready(custom_lstm_forward(x1, params))
    assert out1.shape == (SEQ_LEN, 1, INPUT_DIM)
    np.testing.assert_allclose(np.asarray(out1), np.asarray(ref[:, 0:1, :]),
                               rtol=1e-5, atol=1e-5)

    print("KERNEL_OK")
</pallas_src>

<mosaic_0001>
module attributes {stable_mosaic.version = 11 : i64} {
  func.func @lstm_kernel(%arg0: i32, %arg1: memref<16xf32, #tpu.memory_space<smem>>, %arg2: memref<4x8x128xf32, #tpu.memory_space<vmem>>, %arg3: memref<4x8x128xf32, #tpu.memory_space<vmem>>) attributes {dimension_semantics = [#tpu.dimension_semantics<parallel>], iteration_bounds = array<i64: 2>, scalar_prefetch = 1 : i64, scratch_operands = 0 : i64, tpu.core_type = #tpu.core_type<tc>, window_params = [{transform_indices = @transform_0, window_bounds = array<i64: 4, 8, 128>}, {transform_indices = @transform_1, window_bounds = array<i64: 4, 8, 128>}]} {
    %c0 = arith.constant 0 : index
    %0 = memref.load %arg1[%c0] : memref<16xf32, #tpu.memory_space<smem>>
    %c1 = arith.constant 1 : index
    %1 = memref.load %arg1[%c1] : memref<16xf32, #tpu.memory_space<smem>>
    %c2 = arith.constant 2 : index
    %2 = memref.load %arg1[%c2] : memref<16xf32, #tpu.memory_space<smem>>
    %c3 = arith.constant 3 : index
    %3 = memref.load %arg1[%c3] : memref<16xf32, #tpu.memory_space<smem>>
    %c4 = arith.constant 4 : index
    %4 = memref.load %arg1[%c4] : memref<16xf32, #tpu.memory_space<smem>>
    %c5 = arith.constant 5 : index
    %5 = memref.load %arg1[%c5] : memref<16xf32, #tpu.memory_space<smem>>
    %c6 = arith.constant 6 : index
    %6 = memref.load %arg1[%c6] : memref<16xf32, #tpu.memory_space<smem>>
    %c7 = arith.constant 7 : index
    %7 = memref.load %arg1[%c7] : memref<16xf32, #tpu.memory_space<smem>>
    %c8 = arith.constant 8 : index
    %8 = memref.load %arg1[%c8] : memref<16xf32, #tpu.memory_space<smem>>
    %c9 = arith.constant 9 : index
    %9 = memref.load %arg1[%c9] : memref<16xf32, #tpu.memory_space<smem>>
    %c10 = arith.constant 10 : index
    %10 = memref.load %arg1[%c10] : memref<16xf32, #tpu.memory_space<smem>>
    %c11 = arith.constant 11 : index
    %11 = memref.load %arg1[%c11] : memref<16xf32, #tpu.memory_space<smem>>
    %c12 = arith.constant 12 : index
    %12 = memref.load %arg1[%c12] : memref<16xf32, #tpu.memory_space<smem>>
    %c13 = arith.constant 13 : index
    %13 = memref.load %arg1[%c13] : memref<16xf32, #tpu.memory_space<smem>>
    %cst = arith.constant 0.000000e+00 : f32
    %14 = vector.broadcast %cst : f32 to vector<8x128xf32>
    %cst_0 = arith.constant 0.000000e+00 : f32
    %15 = vector.broadcast %cst_0 : f32 to vector<8x128xf32>
    %c0_1 = arith.constant 0 : index
    %c0_2 = arith.constant 0 : index
    %c0_3 = arith.constant 0 : index
    %16 = vector.load %arg2[%c0_1, %c0_2, %c0_3] : memref<4x8x128xf32, #tpu.memory_space<vmem>>, vector<1x8x128xf32>
    %17 = vector.shape_cast %16 : vector<1x8x128xf32> to vector<8x128xf32>
    %18 = vector.broadcast %0 : f32 to vector<8x128xf32>
    %19 = arith.mulf %18, %17 : vector<8x128xf32>
    %20 = vector.broadcast %4 : f32 to vector<8x128xf32>
    %21 = arith.mulf %20, %14 : vector<8x128xf32>
    %22 = arith.addf %19, %21 : vector<8x128xf32>
    %23 = vector.broadcast %8 : f32 to vector<8x128xf32>
    %24 = arith.addf %22, %23 : vector<8x128xf32>
    %25 = arith.negf %24 : vector<8x128xf32>
    %26 = math.exp %25 : vector<8x128xf32>
    %cst_4 = arith.constant 1.000000e+00 : f32
    %27 = vector.broadcast %cst_4 : f32 to vector<8x128xf32>
    %28 = arith.addf %27, %26 : vector<8x128xf32>
    %29 = arith.divf %27, %28 : vector<8x128xf32>
    %30 = vector.broadcast %1 : f32 to vector<8x128xf32>
    %31 = arith.mulf %30, %17 : vector<8x128xf32>
    %32 = vector.broadcast %5 : f32 to vector<8x128xf32>
    %33 = arith.mulf %32, %14 : vector<8x128xf32>
    %34 = arith.addf %31, %33 : vector<8x128xf32>
    %35 = vector.broadcast %9 : f32 to vector<8x128xf32>
    %36 = arith.addf %34, %35 : vector<8x128xf32>
    %37 = arith.negf %36 : vector<8x128xf32>
    %38 = math.exp %37 : vector<8x128xf32>
    %cst_5 = arith.constant 1.000000e+00 : f32
    %39 = vector.broadcast %cst_5 : f32 to vector<8x128xf32>
    %40 = arith.addf %39, %38 : vector<8x128xf32>
    %41 = arith.divf %39, %40 : vector<8x128xf32>
    %42 = vector.broadcast %2 : f32 to vector<8x128xf32>
    %43 = arith.mulf %42, %17 : vector<8x128xf32>
    %44 = vector.broadcast %6 : f32 to vector<8x128xf32>
    %45 = arith.mulf %44, %14 : vector<8x128xf32>
    %46 = arith.addf %43, %45 : vector<8x128xf32>
    %47 = vector.broadcast %10 : f32 to vector<8x128xf32>
    %48 = arith.addf %46, %47 : vector<8x128xf32>
    %49 = math.tanh %48 : vector<8x128xf32>
    %50 = vector.broadcast %3 : f32 to vector<8x128xf32>
    %51 = arith.mulf %50, %17 : vector<8x128xf32>
    %52 = vector.broadcast %7 : f32 to vector<8x128xf32>
    %53 = arith.mulf %52, %14 : vector<8x128xf32>
    %54 = arith.addf %51, %53 : vector<8x128xf32>
    %55 = vector.broadcast %11 : f32 to vector<8x128xf32>
    %56 = arith.addf %54, %55 : vector<8x128xf32>
    %57 = arith.negf %56 : vector<8x128xf32>
    %58 = math.exp %57 : vector<8x128xf32>
    %cst_6 = arith.constant 1.000000e+00 : f32
    %59 = vector.broadcast %cst_6 : f32 to vector<8x128xf32>
    %60 = arith.addf %59, %58 : vector<8x128xf32>
    %61 = arith.divf %59, %60 : vector<8x128xf32>
    %62 = arith.mulf %41, %15 : vector<8x128xf32>
    %63 = arith.mulf %29, %49 : vector<8x128xf32>
    %64 = arith.addf %62, %63 : vector<8x128xf32>
    %65 = math.tanh %64 : vector<8x128xf32>
    %66 = arith.mulf %61, %65 : vector<8x128xf32>
    %67 = vector.broadcast %12 : f32 to vector<8x128xf32>
    %68 = arith.mulf %67, %66 : vector<8x128xf32>
    %69 = vector.broadcast %13 : f32 to vector<8x128xf32>
    %70 = arith.addf %68, %69 : vector<8x128xf32>
    %c0_7 = arith.constant 0 : index
    %c0_8 = arith.constant 0 : index
    %c0_9 = arith.constant 0 : index
    %71 = vector.load %arg3[%c0_7, %c0_8, %c0_9] : memref<4x8x128xf32, #tpu.memory_space<vmem>>, vector<1x8x128xf32>
    %72 = vector.shape_cast %71 : vector<1x8x128xf32> to vector<8x128xf32>
    %73 = vector.shape_cast %70 : vector<8x128xf32> to vector<1x8x128xf32>
    tpu.vector_store %arg3[%c0_7, %c0_8, %c0_9], %73 {strides = array<i32>} : memref<4x8x128xf32, #tpu.memory_space<vmem>>, vector<1x8x128xf32>,
    %c1_10 = arith.constant 1 : index
    %c0_11 = arith.constant 0 : index
    %c0_12 = arith.constant 0 : index
    %74 = vector.load %arg2[%c1_10, %c0_11, %c0_12] : memref<4x8x128xf32, #tpu.memory_space<vmem>>, vector<1x8x128xf32>
    %75 = vector.shape_cast %74 : vector<1x8x128xf32> to vector<8x128xf32>
    %76 = vector.broadcast %0 : f32 to vector<8x128xf32>
    %77 = arith.mulf %76, %75 : vector<8x128xf32>
    %78 = vector.broadcast %4 : f32 to vector<8x128xf32>
    %79 = arith.mulf %78, %66 : vector<8x128xf32>
    %80 = arith.addf %77, %79 : vector<8x128xf32>
    %81 = vector.broadcast %8 : f32 to vector<8x128xf32>
    %82 = arith.addf %80, %81 : vector<8x128xf32>
    %83 = arith.negf %82 : vector<8x128xf32>
    %84 = math.exp %83 : vector<8x128xf32>
    %cst_13 = arith.constant 1.000000e+00 : f32
    %85 = vector.broadcast %cst_13 : f32 to vector<8x128xf32>
    %86 = arith.addf %85, %84 : vector<8x128xf32>
    %87 = arith.divf %85, %86 : vector<8x128xf32>
    %88 = vector.broadcast %1 : f32 to vector<8x128xf32>
    %89 = arith.mulf %88, %75 : vector<8x128xf32>
    %90 = vector.broadcast %5 : f32 to vector<8x128xf32>
    %91 = arith.mulf %90, %66 : vector<8x128xf32>
    %92 = arith.addf %89, %91 : vector<8x128xf32>
    %93 = vector.broadcast %9 : f32 to vector<8x128xf32>
    %94 = arith.addf %92, %93 : vector<8x128xf32>
    %95 = arith.negf %94 : vector<8x128xf32>
    %96 = math.exp %95 : vector<8x128xf32>
    %cst_14 = arith.constant 1.000000e+00 : f32
    %97 = vector.broadcast %cst_14 : f32 to vector<8x128xf32>
    %98 = arith.addf %97, %96 : vector<8x128xf32>
    %99 = arith.divf %97, %98 : vector<8x128xf32>
    %100 = vector.broadcast %2 : f32 to vector<8x128xf32>
    %101 = arith.mulf %100, %75 : vector<8x128xf32>
    %102 = vector.broadcast %6 : f32 to vector<8x128xf32>
    %103 = arith.mulf %102, %66 : vector<8x128xf32>
    %104 = arith.addf %101, %103 : vector<8x128xf32>
    %105 = vector.broadcast %10 : f32 to vector<8x128xf32>
    %106 = arith.addf %104, %105 : vector<8x128xf32>
    %107 = math.tanh %106 : vector<8x128xf32>
    %108 = vector.broadcast %3 : f32 to vector<8x128xf32>
    %109 = arith.mulf %108, %75 : vector<8x128xf32>
    %110 = vector.broadcast %7 : f32 to vector<8x128xf32>
    %111 = arith.mulf %110, %66 : vector<8x128xf32>
    %112 = arith.addf %109, %111 : vector<8x128xf32>
    %113 = vector.broadcast %11 : f32 to vector<8x128xf32>
    %114 = arith.addf %112, %113 : vector<8x128xf32>
    %115 = arith.negf %114 : vector<8x128xf32>
    %116 = math.exp %115 : vector<8x128xf32>
    %cst_15 = arith.constant 1.000000e+00 : f32
    %117 = vector.broadcast %cst_15 : f32 to vector<8x128xf32>
    %118 = arith.addf %117, %116 : vector<8x128xf32>
    %119 = arith.divf %117, %118 : vector<8x128xf32>
    %120 = arith.mulf %99, %64 : vector<8x128xf32>
    %121 = arith.mulf %87, %107 : vector<8x128xf32>
    %122 = arith.addf %120, %121 : vector<8x128xf32>
    %123 = math.tanh %122 : vector<8x128xf32>
    %124 = arith.mulf %119, %123 : vector<8x128xf32>
    %125 = vector.broadcast %12 : f32 to vector<8x128xf32>
    %126 = arith.mulf %125, %124 : vector<8x128xf32>
    %127 = vector.broadcast %13 : f32 to vector<8x128xf32>
    %128 = arith.addf %126, %127 : vector<8x128xf32>
    %c1_16 = arith.constant 1 : index
    %c0_17 = arith.constant 0 : index
    %c0_18 = arith.constant 0 : index
    %129 = vector.load %arg3[%c1_16, %c0_17, %c0_18] : memref<4x8x128xf32, #tpu.memory_space<vmem>>, vector<1x8x128xf32>
    %130 = vector.shape_cast %129 : vector<1x8x128xf32> to vector<8x128xf32>
    %131 = vector.shape_cast %128 : vector<8x128xf32> to vector<1x8x128xf32>
    tpu.vector_store %arg3[%c1_16, %c0_17, %c0_18], %131 {strides = array<i32>} : memref<4x8x128xf32, #tpu.memory_space<vmem>>, vector<1x8x128xf32>,
    %c2_19 = arith.constant 2 : index
    %c0_20 = arith.constant 0 : index
    %c0_21 = arith.constant 0 : index
    %132 = vector.load %arg2[%c2_19, %c0_20, %c0_21] : memref<4x8x128xf32, #tpu.memory_space<vmem>>, vector<1x8x128xf32>
    %133 = vector.shape_cast %132 : vector<1x8x128xf32> to vector<8x128xf32>
    %134 = vector.broadcast %0 : f32 to vector<8x128xf32>
    %135 = arith.mulf %134, %133 : vector<8x128xf32>
    %136 = vector.broadcast %4 : f32 to vector<8x128xf32>
    %137 = arith.mulf %136, %124 : vector<8x128xf32>
    %138 = arith.addf %135, %137 : vector<8x128xf32>
    %139 = vector.broadcast %8 : f32 to vector<8x128xf32>
    %140 = arith.addf %138, %139 : vector<8x128xf32>
    %141 = arith.negf %140 : vector<8x128xf32>
    %142 = math.exp %141 : vector<8x128xf32>
    %cst_22 = arith.constant 1.000000e+00 : f32
    %143 = vector.broadcast %cst_22 : f32 to vector<8x128xf32>
    %144 = arith.addf %143, %142 : vector<8x128xf32>
    %145 = arith.divf %143, %144 : vector<8x128xf32>
    %146 = vector.broadcast %1 : f32 to vector<8x128xf32>
    %147 = arith.mulf %146, %133 : vector<8x128xf32>
    %148 = vector.broadcast %5 : f32 to vector<8x128xf32>
    %149 = arith.mulf %148, %124 : vector<8x128xf32>
    %150 = arith.addf %147, %149 : vector<8x128xf32>
    %151 = vector.broadcast %9 : f32 to vector<8x128xf32>
    %152 = arith.addf %150, %151 : vector<8x128xf32>
    %153 = arith.negf %152 : vector<8x128xf32>
    %154 = math.exp %153 : vector<8x128xf32>
    %cst_23 = arith.constant 1.000000e+00 : f32
    %155 = vector.broadcast %cst_23 : f32 to vector<8x128xf32>
    %156 = arith.addf %155, %154 : vector<8x128xf32>
    %157 = arith.divf %155, %156 : vector<8x128xf32>
    %158 = vector.broadcast %2 : f32 to vector<8x128xf32>
    %159 = arith.mulf %158, %133 : vector<8x128xf32>
    %160 = vector.broadcast %6 : f32 to vector<8x128xf32>
    %161 = arith.mulf %160, %124 : vector<8x128xf32>
    %162 = arith.addf %159, %161 : vector<8x128xf32>
    %163 = vector.broadcast %10 : f32 to vector<8x128xf32>
    %164 = arith.addf %162, %163 : vector<8x128xf32>
    %165 = math.tanh %164 : vector<8x128xf32>
    %166 = vector.broadcast %3 : f32 to vector<8x128xf32>
    %167 = arith.mulf %166, %133 : vector<8x128xf32>
    %168 = vector.broadcast %7 : f32 to vector<8x128xf32>
    %169 = arith.mulf %168, %124 : vector<8x128xf32>
    %170 = arith.addf %167, %169 : vector<8x128xf32>
    %171 = vector.broadcast %11 : f32 to vector<8x128xf32>
    %172 = arith.addf %170, %171 : vector<8x128xf32>
    %173 = arith.negf %172 : vector<8x128xf32>
    %174 = math.exp %173 : vector<8x128xf32>
    %cst_24 = arith.constant 1.000000e+00 : f32
    %175 = vector.broadcast %cst_24 : f32 to vector<8x128xf32>
    %176 = arith.addf %175, %174 : vector<8x128xf32>
    %177 = arith.divf %175, %176 : vector<8x128xf32>
    %178 = arith.mulf %157, %122 : vector<8x128xf32>
    %179 = arith.mulf %145, %165 : vector<8x128xf32>
    %180 = arith.addf %178, %179 : vector<8x128xf32>
    %181 = math.tanh %180 : vector<8x128xf32>
    %182 = arith.mulf %177, %181 : vector<8x128xf32>
    %183 = vector.broadcast %12 : f32 to vector<8x128xf32>
    %184 = arith.mulf %183, %182 : vector<8x128xf32>
    %185 = vector.broadcast %13 : f32 to vector<8x128xf32>
    %186 = arith.addf %184, %185 : vector<8x128xf32>
    %c2_25 = arith.constant 2 : index
    %c0_26 = arith.constant 0 : index
    %c0_27 = arith.constant 0 : index
    %187 = vector.load %arg3[%c2_25, %c0_26, %c0_27] : memref<4x8x128xf32, #tpu.memory_space<vmem>>, vector<1x8x128xf32>
    %188 = vector.shape_cast %187 : vector<1x8x128xf32> to vector<8x128xf32>
    %189 = vector.shape_cast %186 : vector<8x128xf32> to vector<1x8x128xf32>
    tpu.vector_store %arg3[%c2_25, %c0_26, %c0_27], %189 {strides = array<i32>} : memref<4x8x128xf32, #tpu.memory_space<vmem>>, vector<1x8x128xf32>,
    %c3_28 = arith.constant 3 : index
    %c0_29 = arith.constant 0 : index
    %c0_30 = arith.constant 0 : index
    %190 = vector.load %arg2[%c3_28, %c0_29, %c0_30] : memref<4x8x128xf32, #tpu.memory_space<vmem>>, vector<1x8x128xf32>
    %191 = vector.shape_cast %190 : vector<1x8x128xf32> to vector<8x128xf32>
    %192 = vector.broadcast %0 : f32 to vector<8x128xf32>
    %193 = arith.mulf %192, %191 : vector<8x128xf32>
    %194 = vector.broadcast %4 : f32 to vector<8x128xf32>
    %195 = arith.mulf %194, %182 : vector<8x128xf32>
    %196 = arith.addf %193, %195 : vector<8x128xf32>
    %197 = vector.broadcast %8 : f32 to vector<8x128xf32>
    %198 = arith.addf %196, %197 : vector<8x128xf32>
    %199 = arith.negf %198 : vector<8x128xf32>
    %200 = math.exp %199 : vector<8x128xf32>
    %cst_31 = arith.constant 1.000000e+00 : f32
    %201 = vector.broadcast %cst_31 : f32 to vector<8x128xf32>
    %202 = arith.addf %201, %200 : vector<8x128xf32>
    %203 = arith.divf %201, %202 : vector<8x128xf32>
    %204 = vector.broadcast %1 : f32 to vector<8x128xf32>
    %205 = arith.mulf %204, %191 : vector<8x128xf32>
    %206 = vector.broadcast %5 : f32 to vector<8x128xf32>
    %207 = arith.mulf %206, %182 : vector<8x128xf32>
    %208 = arith.addf %205, %207 : vector<8x128xf32>
    %209 = vector.broadcast %9 : f32 to vector<8x128xf32>
    %210 = arith.addf %208, %209 : vector<8x128xf32>
    %211 = arith.negf %210 : vector<8x128xf32>
    %212 = math.exp %211 : vector<8x128xf32>
    %cst_32 = arith.constant 1.000000e+00 : f32
    %213 = vector.broadcast %cst_32 : f32 to vector<8x128xf32>
    %214 = arith.addf %213, %212 : vector<8x128xf32>
    %215 = arith.divf %213, %214 : vector<8x128xf32>
    %216 = vector.broadcast %2 : f32 to vector<8x128xf32>
    %217 = arith.mulf %216, %191 : vector<8x128xf32>
    %218 = vector.broadcast %6 : f32 to vector<8x128xf32>
    %219 = arith.mulf %218, %182 : vector<8x128xf32>
    %220 = arith.addf %217, %219 : vector<8x128xf32>
    %221 = vector.broadcast %10 : f32 to vector<8x128xf32>
    %222 = arith.addf %220, %221 : vector<8x128xf32>
    %223 = math.tanh %222 : vector<8x128xf32>
    %224 = vector.broadcast %3 : f32 to vector<8x128xf32>
    %225 = arith.mulf %224, %191 : vector<8x128xf32>
    %226 = vector.broadcast %7 : f32 to vector<8x128xf32>
    %227 = arith.mulf %226, %182 : vector<8x128xf32>
    %228 = arith.addf %225, %227 : vector<8x128xf32>
    %229 = vector.broadcast %11 : f32 to vector<8x128xf32>
    %230 = arith.addf %228, %229 : vector<8x128xf32>
    %231 = arith.negf %230 : vector<8x128xf32>
    %232 = math.exp %231 : vector<8x128xf32>
    %cst_33 = arith.constant 1.000000e+00 : f32
    %233 = vector.broadcast %cst_33 : f32 to vector<8x128xf32>
    %234 = arith.addf %233, %232 : vector<8x128xf32>
    %235 = arith.divf %233, %234 : vector<8x128xf32>
    %236 = arith.mulf %215, %180 : vector<8x128xf32>
    %237 = arith.mulf %203, %223 : vector<8x128xf32>
    %238 = arith.addf %236, %237 : vector<8x128xf32>
    %239 = math.tanh %238 : vector<8x128xf32>
    %240 = arith.mulf %235, %239 : vector<8x128xf32>
    %241 = vector.broadcast %12 : f32 to vector<8x128xf32>
    %242 = arith.mulf %241, %240 : vector<8x128xf32>
    %243 = vector.broadcast %13 : f32 to vector<8x128xf32>
    %244 = arith.addf %242, %243 : vector<8x128xf32>
    %c3_34 = arith.constant 3 : index
    %c0_35 = arith.constant 0 : index
    %c0_36 = arith.constant 0 : index
    %245 = vector.load %arg3[%c3_34, %c0_35, %c0_36] : memref<4x8x128xf32, #tpu.memory_space<vmem>>, vector<1x8x128xf32>
    %246 = vector.shape_cast %245 : vector<1x8x128xf32> to vector<8x128xf32>
    %247 = vector.shape_cast %244 : vector<8x128xf32> to vector<1x8x128xf32>
    tpu.vector_store %arg3[%c3_34, %c0_35, %c0_36], %247 {strides = array<i32>} : memref<4x8x128xf32, #tpu.memory_space<vmem>>, vector<1x8x128xf32>,
    return
  }
  func.func @transform_0(%arg0: i32, %arg1: memref<16xf32, #tpu.memory_space<smem>>) -> (i32, i32, i32) {
    %c0_i32 = arith.constant 0 : i32
    %c0_i32_0 = arith.constant 0 : i32
    %c0_i32_1 = arith.constant 0 : i32
    return %c0_i32, %arg0, %c0_i32_0 : i32, i32, i32
  }
  func.func @transform_1(%arg0: i32, %arg1: memref<16xf32, #tpu.memory_space<smem>>) -> (i32, i32, i32) {
    %c0_i32 = arith.constant 0 : i32
    %c0_i32_0 = arith.constant 0 : i32
    %c0_i32_1 = arith.constant 0 : i32
    return %c0_i32, %arg0, %c0_i32_0 : i32, i32, i32
  }
}

</mosaic_0001>

<llo_original>
// kernel: tpu_custom_call.1
$region0: #{tpu_custom_call.1}
  #allocation0 [shape = 'u32[]', space=smem, size = 0x4, offset = 0x4, fixed_abs, tag = 'smem constant byte address 0x4 - core index']
  #allocation1 [shape = 'u32[144,128]{1,0:T(1,128)}', space=vmem, size = 0x12000, scoped, tag = 'internal scratch']
  #allocation2 [shape = 's32[1]{0}', space=sflag, size = 0x4, scoped, tag = 'scoped memory for tpu_custom_call.1']
  #allocation3 [shape = 'u8[512]{0}', space=smem, size = 0x200, scoped, tag = 'prefetched SMEM operand 0']
  %s0 = inlined_call_operand.hbm [shape: f32[16], index: 0, kind: input, shape index: {}]
  %s1 = inlined_call_operand.hbm [shape: f32[4,16,128], index: 1, kind: input, shape index: {}]
  %s2 = inlined_call_operand.hbm [shape: f32[4,16,128], index: 2, kind: output, shape index: {}]
  %s3 = sld [smem:[#allocation0]]
  $region41: #{tpu_custom_call.1} parent=0
    _
  %s5 = ssub.s32 1, %s3
  %s6 = scalar_select 0, %s5, %s3
  %8 = dma.hbm_to_smem %s0, 16, [#allocation3], [#allocation2]
  %9 = dma.done [#allocation2], 16
  %10 = sfence
  $region1: #{tpu_custom_call.1} parent=0
    #allocation4 [shape = 'u8[32768]{0}', space=vmem, size = 0x8000, scoped, tag = 'input window, operand 1']
    #allocation5 [shape = 's32[2]{0}', space=sflag, size = 0x8, scoped, tag = 'scoped memory for tpu_custom_call.1']
    #allocation6 [shape = 's32[2]{0}', space=sflag, size = 0x8, scoped, tag = 'scoped memory for tpu_custom_call.1']
    #allocation7 [shape = 'u8[32768]{0}', space=vmem, size = 0x8000, scoped, tag = 'output window, operand 0']
    %11 = vsyncpa [#allocation5], 0
    %s12 = scalar_lea.sflag [#allocation5], 1
    %13 = vsyncpa %s12, 0
    %14 = vsyncpa [#allocation6], 0
    %s15 = scalar_lea.sflag [#allocation6], 1
    %16 = vsyncpa %s15, 0
    loop: start=0, step=1, limit=4
    $region2: #{tpu_custom_call.1} parent=1 // loop_pre_header
      _
    $region3: #{tpu_custom_call.1} parent=1 // loop_header
      %s18 = sphi 0, %s22
      %p19 = scmp.ge.s32.totalorder %s18, 4
      %s28 = sphi 0, %s30
      %s31 = sphi 0, %s28
      %s32 = sphi 0, %s31
      %s48 = sphi 0, %s32
      %s54 = sphi 0, %s56
      %s57 = sphi 0, %s54
      %s58 = sphi 0, %s57
      %s74 = sphi 0, %s58
    $region4: #{tpu_custom_call.1} parent=1 // loop_header_branch
      %21 = sbr.rel (%p19) target = $region8
    $region5: #{tpu_custom_call.1} parent=1 // loop_body
      %s23 = ssub.s32 %s18, 1
      %s24 = ssub.s32 %s18, 2
      %s25 = sadd.s32 %s18, 1
      %s26 = ssub.s32 %s18, %s25
      %p27 = scmp.eq.s32.totalorder %s26, 0
      %s29 = sadd.s32 %s28, 1
      %s30 = scalar_select %p27, %s28, %s29
      %p33 = pneg %p27
      %p34 = scmp.eq.s32.totalorder %s18, 1
      %p35 = por %p33, %p34
      %p36 = scmp.ne.s32.totalorder %s28, %s31
      %p37 = scmp.eq.s32.totalorder %s18, 0
      %p38 = por %p36, %p37
      %p39 = scmp.ne.s32.totalorder %s28, %s31
      %p40 = scmp.eq.s32.totalorder %s23, 1
      %p41 = por %p39, %p40
      %p42 = scmp.ne.s32.totalorder %s31, %s32
      %p43 = scmp.eq.s32.totalorder %s23, 0
      %p44 = por %p42, %p43
      %p45 = scmp.ne.s32.totalorder %s31, %s32
      %p46 = scmp.eq.s32.totalorder %s24, 1
      %p47 = por %p45, %p46
      %p49 = scmp.ne.s32.totalorder %s32, %s48
      %p50 = scmp.eq.s32.totalorder %s24, 0
      %p51 = por %p49, %p50
      %s52 = ssub.s32 %s18, %s25
      %p53 = scmp.eq.s32.totalorder %s52, 0
      %s55 = sadd.s32 %s54, 1
      %s56 = scalar_select %p53, %s54, %s55
      %p59 = pneg %p53
      %p60 = scmp.eq.s32.totalorder %s18, 1
      %p61 = por %p59, %p60
      %p62 = scmp.ne.s32.totalorder %s54, %s57
      %p63 = scmp.eq.s32.totalorder %s18, 0
      %p64 = por %p62, %p63
      %p65 = scmp.ne.s32.totalorder %s54, %s57
      %p66 = scmp.eq.s32.totalorder %s23, 1
      %p67 = por %p65, %p66
      %p68 = scmp.ne.s32.totalorder %s57, %s58
      %p69 = scmp.eq.s32.totalorder %s23, 0
      %p70 = por %p68, %p69
      %p71 = scmp.ne.s32.totalorder %s57, %s58
      %p72 = scmp.eq.s32.totalorder %s24, 1
      %p73 = por %p71, %p72
      %p75 = scmp.ne.s32.totalorder %s58, %s74
      %p76 = scmp.eq.s32.totalorder %s24, 0
      %p77 = por %p75, %p76
      %p78 = scmp.le.s32.totalorder 1, %s18
      %p79 = scmp.lt.s32.totalorder %s18, 3
      %p80 = pnand %p78, %p79
      %p81 = pneg %p80
      // Predicated region
      $region9: #{tpu_custom_call.1} parent=5 // pred_check
        _
      $region10: #{tpu_custom_call.1} parent=5 // pred_check_branch
        %83 = sbr.rel (%p80) target = $region12
      $region11: #{tpu_custom_call.1} parent=5 // pred_region
        %s84 = ssub.s32 %s18, 1
      $region12: #{tpu_custom_call.1} parent=5 // pred_fallthru
        _
      %p85 = scmp.lt.s32.totalorder %s18, 2
      // Predicated region
      $region13: #{tpu_custom_call.1} parent=5 // pred_check
        %p86 = pneg %p85
      $region14: #{tpu_custom_call.1} parent=5 // pred_check_branch
        %88 = sbr.rel (%p86) target = $region16
      $region15: #{tpu_custom_call.1} parent=5 // pred_region
        // Predicated region
        $region17: #{tpu_custom_call.1} parent=15 // pred_check
          %p89 = pneg %p38
        $region18: #{tpu_custom_call.1} parent=15 // pred_check_branch
          %91 = sbr.rel (%p89) target = $region20
        $region19: #{tpu_custom_call.1} parent=15 // pred_region
          %s92 = sand.u32 %s28, 1
          %s93 = scalar_lea.sflag [#allocation5], %s92
          %s94 = sand.u32 %s28, 1
          %s95 = smul.addr %s94, 32
          %s96 = scalar_lea.vmem [#allocation4], %s95
          %s98 = ssub.s32 512, 512
          %99 = vsyncadd %s93, %s98
          %s100 = smul.addr %s18, 128
          %s101 = scalar_lea.hbm %s1, %s100
          %s102 = sshll.u32 %s96, 4
          %s103 = int_to_ptr.vmem [resolvable:$true] %s102
          %108 = dma.hbm_to_vmem [thread:$0]  %s101, 512, %s103, %s93, 256, 128, 8
        $region20: #{tpu_custom_call.1} parent=15 // pred_fallthru
          _
      $region16: #{tpu_custom_call.1} parent=5 // pred_fallthru
        _
      %p109 = scmp.le.s32.totalorder 1, %s18
      %p110 = scmp.lt.s32.totalorder %s18, 3
      %p111 = pnand %p109, %p110
      %p112 = pneg %p111
      // Predicated region
      $region21: #{tpu_custom_call.1} parent=5 // pred_check
        _
      $region22: #{tpu_custom_call.1} parent=5 // pred_check_branch
        %114 = sbr.rel (%p111) target = $region24
      $region23: #{tpu_custom_call.1} parent=5 // pred_region
        %s115 = ssub.s32 %s18, 1
        %s116 = sand.u32 %s31, 1
        %s117 = scalar_lea.sflag [#allocation5], %s116
        %s118 = sand.u32 %s31, 1
        %s119 = smul.addr %s118, 32
        %s120 = scalar_lea.vmem [#allocation4], %s119
        // Predicated region
        $region25: #{tpu_custom_call.1} parent=23 // pred_check
          %p121 = pneg %p44
        $region26: #{tpu_custom_call.1} parent=23 // pred_check_branch
          %123 = sbr.rel (%p121) target = $region28
        $region27: #{tpu_custom_call.1} parent=23 // pred_region
          %124 = dma.done %s117, 512
        $region28: #{tpu_custom_call.1} parent=23 // pred_fallthru
          _
        %s125 = sand.u32 %s31, 1
        %s126 = scalar_lea.sflag [#allocation5], %s125
        %s127 = sand.u32 %s31, 1
        %s128 = smul.addr %s127, 32
        %s129 = scalar_lea.vmem [#allocation4], %s128
        %p130 = pneg %p44
        %p131 = pneg %p41
        %p132 = pneg %p70
        %p133 = pneg %p67
        %s134 = sand.u32 %s57, 1
        %s135 = scalar_lea.sflag [#allocation6], %s134
        %s136 = sand.u32 %s57, 1
        %s137 = smul.addr %s136, 32
        %s138 = scalar_lea.vmem [#allocation7], %s137
        %s139 = sld [smem:[#allocation3]]
        %s140 = sld [smem:[#allocation3 + $0x1]]
        %s141 = sld [smem:[#allocation3 + $0x2]]
        %s142 = sld [smem:[#allocation3 + $0x3]]
        %s143 = sld [smem:[#allocation3 + $0x4]]
        %s144 = sld [smem:[#allocation3 + $0x5]]
        %s145 = sld [smem:[#allocation3 + $0x6]]
        %s146 = sld [smem:[#allocation3 + $0x7]]
        %s147 = sld [smem:[#allocation3 + $0x8]]
        %s148 = sld [smem:[#allocation3 + $0x9]]
        %s149 = sld [smem:[#allocation3 + $0xa]]
        %s150 = sld [smem:[#allocation3 + $0xb]]
        %s151 = sld [smem:[#allocation3 + $0xc]]
        %s152 = sld [smem:[#allocation3 + $0xd]]
        %v153 = vld [vmem:[%s120] sm:$0xff]
        %v154 = vstv %s139
        %v155 = vmul.f32 %v154, %v153
        %v156 = vstv %s143
        %v157 = vmul.f32 %v156, 0.0
        %v158 = vadd.f32 %v155, %v157
        %v159 = vstv %s147
        %v160 = vadd.f32 %v158, %v159
        %v161 = vxor.u32 %v160, 2147483648
        %v162 = vmul.f32 %v161, 1.442695
        %v163 = vpow.pop %v162
        %v164 = vadd.f32 %v163, 1.0
        %v165 = vrcp.pop %v164
        %v166 = vmul.f32 1.0, %v165
        %v167 = vstv %s140
        %v168 = vmul.f32 %v167, %v153
        %v169 = vstv %s144
        %v170 = vmul.f32 %v169, 0.0
        %v171 = vadd.f32 %v168, %v170
        %v172 = vstv %s148
        %v173 = vadd.f32 %v171, %v172
        %v174 = vxor.u32 %v173, 2147483648
        %v175 = vmul.f32 %v174, 1.442695
        %v176 = vpow.pop %v175
        %v177 = vadd.f32 %v176, 1.0
        %v178 = vrcp.pop %v177
        %v179 = vmul.f32 1.0, %v178
        %v180 = vstv %s141
        %v181 = vmul.f32 %v180, %v153
        %v182 = vstv %s145
        %v183 = vmul.f32 %v182, 0.0
        %v184 = vadd.f32 %v181, %v183
        %v185 = vstv %s149
        %v186 = vadd.f32 %v184, %v185
        %v187 = vtanh.pop %v186
        %v188 = vstv %s142
        %v189 = vmul.f32 %v188, %v153
        %v190 = vstv %s146
        %v191 = vmul.f32 %v190, 0.0
        %v192 = vadd.f32 %v189, %v191
        %v193 = vstv %s150
        %v194 = vadd.f32 %v192, %v193
        %v195 = vxor.u32 %v194, 2147483648
        %v196 = vmul.f32 %v195, 1.442695
        %v197 = vpow.pop %v196
        %v198 = vadd.f32 %v197, 1.0
        %v199 = vrcp.pop %v198
        %v200 = vmul.f32 1.0, %v199
        %v201 = vmul.f32 %v179, 0.0
        %v202 = vmul.f32 %v166, %v187
        %v203 = vadd.f32 %v201, %v202
        %v204 = vtanh.pop %v203
        %v205 = vmul.f32 %v200, %v204
        %v206 = vstv %s151
        %v207 = vmul.f32 %v206, %v205
        %v208 = vstv %s152
        %v209 = vadd.f32 %v207, %v208
        %210 = vst [vmem:[%s138] sm:$0xff] %v209
        %s211 = scalar_lea.vmem %s120, 8 [#allocation4]
        %v212 = vld [vmem:[%s211] sm:$0xff]
        %v213 = vmul.f32 %v154, %v212
        %v214 = vmul.f32 %v156, %v205
        %v215 = vadd.f32 %v213, %v214
        %v216 = vadd.f32 %v215, %v159
        %v217 = vxor.u32 %v216, 2147483648
        %v218 = vmul.f32 %v217, 1.442695
        %v219 = vpow.pop %v218
        %v220 = vadd.f32 %v219, 1.0
        %v221 = vrcp.pop %v220
        %v222 = vmul.f32 1.0, %v221
        %v223 = vmul.f32 %v167, %v212
        %v224 = vmul.f32 %v169, %v205
        %v225 = vadd.f32 %v223, %v224
        %v226 = vadd.f32 %v225, %v172
        %v227 = vxor.u32 %v226, 2147483648
        %v228 = vmul.f32 %v227, 1.442695
        %v229 = vpow.pop %v228
        %v230 = vadd.f32 %v229, 1.0
        %v231 = vrcp.pop %v230
        %v232 = vmul.f32 1.0, %v231
        %v233 = vmul.f32 %v180, %v212
        %v234 = vmul.f32 %v182, %v205
        %v235 = vadd.f32 %v233, %v234
        %v236 = vadd.f32 %v235, %v185
        %v237 = vtanh.pop %v236
        %v238 = vmul.f32 %v188, %v212
        %v239 = vmul.f32 %v190, %v205
        %v240 = vadd.f32 %v238, %v239
        %v241 = vadd.f32 %v240, %v193
        %v242 = vxor.u32 %v241, 2147483648
        %v243 = vmul.f32 %v242, 1.442695
        %v244 = vpow.pop %v243
        %v245 = vadd.f32 %v244, 1.0
        %v246 = vrcp.pop %v245
        %v247 = vmul.f32 1.0, %v246
        %v248 = vmul.f32 %v232, %v203
        %v249 = vmul.f32 %v222, %v237
        %v250 = vadd.f32 %v248, %v249
        %v251 = vtanh.pop %v250
        %v252 = vmul.f32 %v247, %v251
        %v253 = vmul.f32 %v206, %v252
        %v254 = vadd.f32 %v253, %v208
        %s255 = scalar_lea.vmem %s138, 8 [#allocation7]
        %256 = vst [vmem:[%s255] sm:$0xff] %v254
        %s257 = scalar_lea.vmem %s120, 16 [#allocation4]
        %v258 = vld [vmem:[%s257] sm:$0xff]
        %v259 = vmul.f32 %v154, %v258
        %v260 = vmul.f32 %v156, %v252
        %v261 = vadd.f32 %v259, %v260
        %v262 = vadd.f32 %v261, %v159
        %v263 = vxor.u32 %v262, 2147483648
        %v264 = vmul.f32 %v263, 1.442695
        %v265 = vpow.pop %v264
        %v266 = vadd.f32 %v265, 1.0
        %v267 = vrcp.pop %v266
        %v268 = vmul.f32 1.0, %v267
        %v269 = vmul.f32 %v167, %v258
        %v270 = vmul.f32 %v169, %v252
        %v271 = vadd.f32 %v269, %v270
        %v272 = vadd.f32 %v271, %v172
        %v273 = vxor.u32 %v272, 2147483648
        %v274 = vmul.f32 %v273, 1.442695
        %v275 = vpow.pop %v274
        %v276 = vadd.f32 %v275, 1.0
        %v277 = vrcp.pop %v276
        %v278 = vmul.f32 1.0, %v277
        %v279 = vmul.f32 %v180, %v258
        %v280 = vmul.f32 %v182, %v252
        %v281 = vadd.f32 %v279, %v280
        %v282 = vadd.f32 %v281, %v185
        %v283 = vtanh.pop %v282
        %v284 = vmul.f32 %v188, %v258
        %v285 = vmul.f32 %v190, %v252
        %v286 = vadd.f32 %v284, %v285
        %v287 = vadd.f32 %v286, %v193
        %v288 = vxor.u32 %v287, 2147483648
        %v289 = vmul.f32 %v288, 1.442695
        %v290 = vpow.pop %v289
        %v291 = vadd.f32 %v290, 1.0
        %v292 = vrcp.pop %v291
        %v293 = vmul.f32 1.0, %v292
        %v294 = vmul.f32 %v278, %v250
        %v295 = vmul.f32 %v268, %v283
        %v296 = vadd.f32 %v294, %v295
        %v297 = vtanh.pop %v296
        %v298 = vmul.f32 %v293, %v297
        %v299 = vmul.f32 %v206, %v298
        %v300 = vadd.f32 %v299, %v208
        %s301 = scalar_lea.vmem %s138, 16 [#allocation7]
        %302 = vst [vmem:[%s301] sm:$0xff] %v300
        %s303 = scalar_lea.vmem %s120, 24 [#allocation4]
        %v304 = vld [vmem:[%s303] sm:$0xff]
        %v305 = vmul.f32 %v154, %v304
        %v306 = vmul.f32 %v156, %v298
        %v307 = vadd.f32 %v305, %v306
        %v308 = vadd.f32 %v307, %v159
        %v309 = vxor.u32 %v308, 2147483648
        %v310 = vmul.f32 %v309, 1.442695
        %v311 = vpow.pop %v310
        %v312 = vadd.f32 %v311, 1.0
        %v313 = vrcp.pop %v312
        %v314 = vmul.f32 1.0, %v313
        %v315 = vmul.f32 %v167, %v304
        %v316 = vmul.f32 %v169, %v298
        %v317 = vadd.f32 %v315, %v316
        %v318 = vadd.f32 %v317, %v172
        %v319 = vxor.u32 %v318, 2147483648
        %v320 = vmul.f32 %v319, 1.442695
        %v321 = vpow.pop %v320
        %v322 = vadd.f32 %v321, 1.0
        %v323 = vrcp.pop %v322
        %v324 = vmul.f32 1.0, %v323
        %v325 = vmul.f32 %v180, %v304
        %v326 = vmul.f32 %v182, %v298
        %v327 = vadd.f32 %v325, %v326
        %v328 = vadd.f32 %v327, %v185
        %v329 = vtanh.pop %v328
        %v330 = vmul.f32 %v188, %v304
        %v331 = vmul.f32 %v190, %v298
        %v332 = vadd.f32 %v330, %v331
        %v333 = vadd.f32 %v332, %v193
        %v334 = vxor.u32 %v333, 2147483648
        %v335 = vmul.f32 %v334, 1.442695
        %v336 = vpow.pop %v335
        %v337 = vadd.f32 %v336, 1.0
        %v338 = vrcp.pop %v337
        %v339 = vmul.f32 1.0, %v338
        %v340 = vmul.f32 %v324, %v296
        %v341 = vmul.f32 %v314, %v329
        %v342 = vadd.f32 %v340, %v341
        %v343 = vtanh.pop %v342
        %v344 = vmul.f32 %v339, %v343
        %v345 = vmul.f32 %v206, %v344
        %v346 = vadd.f32 %v345, %v208
        %s347 = scalar_lea.vmem %s138, 24 [#allocation7]
        %348 = vst [vmem:[%s347] sm:$0xff] %v346
        %s349 = sand.u32 %s57, 1
        %s350 = scalar_lea.sflag [#allocation6], %s349
        %s351 = sand.u32 %s57, 1
        %s352 = smul.addr %s351, 32
        %s353 = scalar_lea.vmem [#allocation7], %s352
        // Predicated region
        $region29: #{tpu_custom_call.1} parent=23 // pred_check
          %p354 = pneg %p67
        $region30: #{tpu_custom_call.1} parent=23 // pred_check_branch
          %356 = sbr.rel (%p354) target = $region32
        $region31: #{tpu_custom_call.1} parent=23 // pred_region
          %s358 = ssub.s32 512, 512
          %359 = vsyncadd %s350, %s358
          %s360 = smul.addr %s23, 128
          %s361 = scalar_lea.hbm %s2, %s360
          %s362 = sshll.u32 %s353, 4
          %s363 = int_to_ptr.vmem [resolvable:$true] %s362
          %368 = dma.vmem_to_hbm [thread:$0]  %s363, 512, %s361, %s350, 128, 256, 8
        $region32: #{tpu_custom_call.1} parent=23 // pred_fallthru
          _
      $region24: #{tpu_custom_call.1} parent=5 // pred_fallthru
        _
      %p369 = scmp.le.s32.totalorder 2, %s18
      // Predicated region
      $region33: #{tpu_custom_call.1} parent=5 // pred_check
        %p370 = pneg %p369
      $region34: #{tpu_custom_call.1} parent=5 // pred_check_branch
        %372 = sbr.rel (%p370) target = $region36
      $region35: #{tpu_custom_call.1} parent=5 // pred_region
        %s373 = ssub.s32 %s18, 2
        // Predicated region
        $region37: #{tpu_custom_call.1} parent=35 // pred_check
          %p374 = pneg %p73
        $region38: #{tpu_custom_call.1} parent=35 // pred_check_branch
          %376 = sbr.rel (%p374) target = $region40
        $region39: #{tpu_custom_call.1} parent=35 // pred_region
          %s377 = sand.u32 %s58, 1
          %s378 = scalar_lea.sflag [#allocation6], %s377
          %s379 = sand.u32 %s58, 1
          %s380 = smul.addr %s379, 32
          %s381 = scalar_lea.vmem [#allocation7], %s380
          %382 = dma.done %s378, 512
        $region40: #{tpu_custom_call.1} parent=35 // pred_fallthru
          _
      $region36: #{tpu_custom_call.1} parent=5 // pred_fallthru
        _
    $region6: #{tpu_custom_call.1} parent=1 // loop_footer
      %s22 = sadd.s32 1, %s18
    $region7: #{tpu_custom_call.1} parent=1 // loop_footer_branch
      %17 = sbr.rel target = $region3
    $region8: #{tpu_custom_call.1} parent=1 // loop_exit
      _
    %383 = vsyncpa [#allocation5], 1
    %s384 = scalar_lea.sflag [#allocation5], 1
    %385 = vsyncpa %s384, 1
    %386 = vsyncpa [#allocation6], 1
    %s387 = scalar_lea.sflag [#allocation6], 1
    %388 = vsyncpa %s387, 1

</llo_original>
